<compile_context>
chip_gen: v7x
topology: tpu7x:2x2x1
jax: 0.10.0
libtpu: 0.0.40
codegen_flags: <defaults>
</compile_context>

<pallas_src>
import functools

import jax
import jax.numpy as jnp
from jax.experimental import pallas as pl
from jax.experimental.pallas import tpu as pltpu


def actor_kernel(x_ref, w1_ref, b1_ref, w2_ref, b2_ref, w3_ref, b3_ref, out_ref):
    # One batch tile per grid step.  Weights/biases are the full (small) arrays and stay
    # VMEM-resident across steps.  Matmuls run in bf16 on the MXU with f32 accumulation.
    x = x_ref[...]                                                      # (TM, in) bf16

    h1 = jnp.dot(x, w1_ref[...], preferred_element_type=jnp.float32) + b1_ref[...]
    h1 = jnp.maximum(h1, 0.0).astype(jnp.bfloat16)

    h2 = jnp.dot(h1, w2_ref[...], preferred_element_type=jnp.float32) + b2_ref[...]
    h2 = jnp.maximum(h2, 0.0).astype(jnp.bfloat16)

    logits = jnp.dot(h2, w3_ref[...], preferred_element_type=jnp.float32) + b3_ref[...]

    # Numerically stable softmax over the (un-padded) action axis.
    m = jnp.max(logits, axis=1, keepdims=True)
    e = jnp.exp(logits - m)
    denom = jnp.sum(e, axis=1, keepdims=True)
    # EUP approx reciprocal + one Newton refinement on the (TM, 1) denominator:
    # ~1e-6 relative error, so rows sum to 1 within normal f32 noise.
    r = pl.reciprocal(denom, approx=True)
    r = r * (2.0 - denom * r)
    out_ref[...] = (e * r).astype(out_ref.dtype)


def _round_up(x, m):
    return ((x + m - 1) // m) * m


def _cdiv(a, b):
    return -(-a // b)


def _choose_batch_tile(batch, tm_max):
    """Pick (tile_rows, padded_batch): 16-row aligned, balanced tiles, >=2 tiles when useful."""
    b16 = _round_up(max(int(batch), 1), 16)          # bf16 packs 16 sublanes per vreg
    tm_max = max(16, _round_up(int(tm_max), 16))
    if b16 <= tm_max:
        if b16 >= 32:
            tm = _round_up(_cdiv(b16, 2), 16)        # >=2 grid steps -> both v7x TensorCores
        else:
            tm = b16                                 # tiny batch: one tile, no point splitting
    else:
        n_tiles = _cdiv(b16, tm_max)
        tm = _round_up(_cdiv(b16, n_tiles), 16)      # balanced -> no near-empty trailing tile
    return tm, _round_up(b16, tm)


def prepare_actor_params(w1, b1, w2, b2, w3, b3):
    """One-time parameter prep (hoisted out of the forward hot path).

    Weights are pre-cast to bf16 (MXU-native on v5e/v6e/v7x); biases kept in f32 as (1, N) rows.
    """
    as_row = lambda b: jnp.asarray(b, jnp.float32).reshape(1, -1)
    return (jnp.asarray(w1, jnp.bfloat16), as_row(b1),
            jnp.asarray(w2, jnp.bfloat16), as_row(b2),
            jnp.asarray(w3, jnp.bfloat16), as_row(b3))


@functools.partial(jax.jit, static_argnames=("tm_max",))
def actor_forward(state, params, tm_max=2048):
    """softmax(relu(relu(state@W1+b1)@W2+b2)@W3+b3, axis=1) via a single Pallas kernel."""
    w1, b1, w2, b2, w3, b3 = params
    batch, input_dims = state.shape
    n_actions = w3.shape[1]

    tm, b_pad = _choose_batch_tile(batch, tm_max)

    # Activations are cast per call (they change every call); weights were prepared once.
    x16 = state.astype(jnp.bfloat16)
    if b_pad != batch:
        x16 = jnp.pad(x16, ((0, b_pad - batch), (0, 0)))

    resident = lambda a: pl.BlockSpec(a.shape, lambda i: (0, 0))   # VMEM-resident params

    out = pl.pallas_call(
        actor_kernel,
        out_shape=jax.ShapeDtypeStruct((b_pad, n_actions), jnp.float32),
        grid=(b_pad // tm,),
        in_specs=[
            pl.BlockSpec((tm, input_dims), lambda i: (i, 0)),      # streamed batch tile
            resident(w1), resident(b1),
            resident(w2), resident(b2),
            resident(w3), resident(b3),
        ],
        # Narrow (tm, n_actions) out block: last block dim == full array dim, so no 128-lane pad
        # is required; writeback is exactly batch*n_actions*4 bytes.
        out_specs=pl.BlockSpec((tm, n_actions), lambda i: (i, 0)),
        compiler_params=pltpu.CompilerParams(
            dimension_semantics=("parallel",),                     # megacore sharding on v7x
            vmem_limit_bytes=48 * 1024 * 1024,                     # headroom for large tm on v5e
        ),
    )(x16, w1, b1, w2, b2, w3, b3)

    if b_pad != batch:
        out = out[:batch]
    return out


def init_linear(key, fan_in, fan_out):
    # PyTorch nn.Linear default init: U(-1/sqrt(fan_in), 1/sqrt(fan_in)) for W and b.
    kw, kb = jax.random.split(key)
    bound = 1.0 / jnp.sqrt(jnp.float32(fan_in))
    w = jax.random.uniform(kw, (fan_in, fan_out), jnp.float32, -bound, bound)
    b = jax.random.uniform(kb, (1, fan_out), jnp.float32, -bound, bound)
    return w, b


if __name__ == "__main__":
    # Small shapes consistent with ActorNetwork(alpha, input_dims, fc1_dims, fc2_dims, n_actions).
    # Hidden widths are multiples of 128 (lane-friendly; native on v5e's 128x128 MXU).
    batch, input_dims, fc1_dims, fc2_dims, n_actions = 8, 16, 128, 128, 8

    key = jax.random.PRNGKey(0)
    k_state, k1, k2, k3 = jax.random.split(key, 4)

    state = jax.random.normal(k_state, (batch, input_dims), jnp.float32)
    w1, b1 = init_linear(k1, input_dims, fc1_dims)
    w2, b2 = init_linear(k2, fc1_dims, fc2_dims)
    w3, b3 = init_linear(k3, fc2_dims, n_actions)

    # One-time weight prep (bf16 cast / bias layout), per the perf review.
    params = prepare_actor_params(w1, b1, w2, b2, w3, b3)

    pi = actor_forward(state, params)
    jax.block_until_ready(pi)

    # Reference in plain JAX with the same bf16 matmul-input casts (f32 accumulate) as the kernel.
    bf = lambda a: a.astype(jnp.bfloat16).astype(jnp.float32)
    h1 = jax.nn.relu(bf(state) @ bf(w1) + b1)
    h2 = jax.nn.relu(bf(h1) @ bf(w2) + b2)
    ref = jax.nn.softmax(bf(h2) @ bf(w3) + b3, axis=1)

    assert pi.shape == (batch, n_actions)
    assert jnp.allclose(pi, ref, atol=2e-3), "mismatch vs reference"
    assert jnp.allclose(jnp.sum(pi, axis=1), 1.0, atol=1e-4), "softmax rows must sum to 1"

    # TODO(synk): Adam optimizer, checkpoint save/load, and device placement from the PyTorch
    # module are training/infra-side and intentionally not part of the forward kernel.
    print("KERNEL_OK")
</pallas_src>

<mosaic_0001>
module attributes {stable_mosaic.version = 11 : i64} {
  func.func @actor_kernel(%arg0: i32, %arg1: memref<16x16xbf16, #tpu.memory_space<vmem>>, %arg2: memref<16x128xbf16, #tpu.memory_space<vmem>>, %arg3: memref<1x128xf32, #tpu.memory_space<vmem>>, %arg4: memref<128x128xbf16, #tpu.memory_space<vmem>>, %arg5: memref<1x128xf32, #tpu.memory_space<vmem>>, %arg6: memref<128x8xbf16, #tpu.memory_space<vmem>>, %arg7: memref<1x8xf32, #tpu.memory_space<vmem>>, %arg8: memref<16x8xf32, #tpu.memory_space<vmem>>) attributes {dimension_semantics = [#tpu.dimension_semantics<parallel>], iteration_bounds = array<i64: 1>, scalar_prefetch = 0 : i64, scratch_operands = 0 : i64, tpu.core_type = #tpu.core_type<tc>, window_params = [{transform_indices = @transform_0, window_bounds = array<i64: 16, 16>}, {pipeline_mode = #tpu.pipeline_mode<synchronous>, transform_indices = @transform_1, window_bounds = array<i64: 16, 128>}, {pipeline_mode = #tpu.pipeline_mode<synchronous>, transform_indices = @transform_2, window_bounds = array<i64: 1, 128>}, {pipeline_mode = #tpu.pipeline_mode<synchronous>, transform_indices = @transform_3, window_bounds = array<i64: 128, 128>}, {pipeline_mode = #tpu.pipeline_mode<synchronous>, transform_indices = @transform_4, window_bounds = array<i64: 1, 128>}, {pipeline_mode = #tpu.pipeline_mode<synchronous>, transform_indices = @transform_5, window_bounds = array<i64: 128, 8>}, {pipeline_mode = #tpu.pipeline_mode<synchronous>, transform_indices = @transform_6, window_bounds = array<i64: 1, 8>}, {transform_indices = @transform_7, window_bounds = array<i64: 16, 8>}]} {
    %c0 = arith.constant 0 : index
    %c0_0 = arith.constant 0 : index
    %0 = vector.load %arg1[%c0, %c0_0] : memref<16x16xbf16, #tpu.memory_space<vmem>>, vector<16x16xbf16>
    %c0_1 = arith.constant 0 : index
    %c0_2 = arith.constant 0 : index
    %1 = vector.load %arg2[%c0_1, %c0_2] : memref<16x128xbf16, #tpu.memory_space<vmem>>, vector<16x128xbf16>
    %cst = arith.constant dense<0.000000e+00> : vector<16x128xf32>
    %2 = tpu.matmul %0, %1, %cst {dimension_numbers = #tpu.dot_dimension_numbers<[1], [0], [0], [1], [0, 0, 1, 1], [], []>} : vector<16x16xbf16>, vector<16x128xbf16>, vector<16x128xf32> -> vector<16x128xf32>
    %c0_3 = arith.constant 0 : index
    %c0_4 = arith.constant 0 : index
    %3 = vector.load %arg3[%c0_3, %c0_4] : memref<1x128xf32, #tpu.memory_space<vmem>>, vector<1x128xf32>
    %4 = vector.broadcast %3 : vector<1x128xf32> to vector<16x128xf32>
    %5 = arith.addf %2, %4 : vector<16x128xf32>
    %cst_5 = arith.constant 0.000000e+00 : f32
    %6 = vector.broadcast %cst_5 : f32 to vector<16x128xf32>
    %7 = arith.maximumf %5, %6 : vector<16x128xf32>
    %8 = arith.truncf %7 : vector<16x128xf32> to vector<16x128xbf16>
    %c0_6 = arith.constant 0 : index
    %c0_7 = arith.constant 0 : index
    %9 = vector.load %arg4[%c0_6, %c0_7] : memref<128x128xbf16, #tpu.memory_space<vmem>>, vector<128x128xbf16>
    %cst_8 = arith.constant dense<0.000000e+00> : vector<16x128xf32>
    %10 = tpu.matmul %8, %9, %cst_8 {dimension_numbers = #tpu.dot_dimension_numbers<[1], [0], [0], [1], [0, 0, 1, 1], [], []>} : vector<16x128xbf16>, vector<128x128xbf16>, vector<16x128xf32> -> vector<16x128xf32>
    %c0_9 = arith.constant 0 : index
    %c0_10 = arith.constant 0 : index
    %11 = vector.load %arg5[%c0_9, %c0_10] : memref<1x128xf32, #tpu.memory_space<vmem>>, vector<1x128xf32>
    %12 = vector.broadcast %11 : vector<1x128xf32> to vector<16x128xf32>
    %13 = arith.addf %10, %12 : vector<16x128xf32>
    %cst_11 = arith.constant 0.000000e+00 : f32
    %14 = vector.broadcast %cst_11 : f32 to vector<16x128xf32>
    %15 = arith.maximumf %13, %14 : vector<16x128xf32>
    %16 = arith.truncf %15 : vector<16x128xf32> to vector<16x128xbf16>
    %c0_12 = arith.constant 0 : index
    %c0_13 = arith.constant 0 : index
    %17 = vector.load %arg6[%c0_12, %c0_13] : memref<128x8xbf16, #tpu.memory_space<vmem>>, vector<128x8xbf16>
    %cst_14 = arith.constant dense<0.000000e+00> : vector<16x8xf32>
    %18 = tpu.matmul %16, %17, %cst_14 {dimension_numbers = #tpu.dot_dimension_numbers<[1], [0], [0], [1], [0, 0, 1, 1], [], []>} : vector<16x128xbf16>, vector<128x8xbf16>, vector<16x8xf32> -> vector<16x8xf32>
    %c0_15 = arith.constant 0 : index
    %c0_16 = arith.constant 0 : index
    %19 = vector.load %arg7[%c0_15, %c0_16] : memref<1x8xf32, #tpu.memory_space<vmem>>, vector<1x8xf32>
    %20 = vector.broadcast %19 : vector<1x8xf32> to vector<16x8xf32>
    %21 = arith.addf %18, %20 : vector<16x8xf32>
    %cst_17 = arith.constant dense<0xFF800000> : vector<16xf32>
    %22 = vector.multi_reduction <maximumf>, %21, %cst_17 [1] : vector<16x8xf32> to vector<16xf32>
    %23 = vector.shape_cast %22 : vector<16xf32> to vector<16x1xf32>
    %24 = vector.broadcast %23 : vector<16x1xf32> to vector<16x8xf32>
    %25 = arith.subf %21, %24 : vector<16x8xf32>
    %26 = math.exp %25 : vector<16x8xf32>
    %cst_18 = arith.constant dense<0.000000e+00> : vector<16xf32>
    %27 = vector.multi_reduction <add>, %26, %cst_18 [1] : vector<16x8xf32> to vector<16xf32>
    %28 = vector.shape_cast %27 : vector<16xf32> to vector<16x1xf32>
    %29 = tpu.reciprocal %28 {approx = true} : vector<16x1xf32> -> vector<16x1xf32>
    %30 = arith.mulf %28, %29 : vector<16x1xf32>
    %cst_19 = arith.constant 2.000000e+00 : f32
    %31 = vector.broadcast %cst_19 : f32 to vector<16x1xf32>
    %32 = arith.subf %31, %30 : vector<16x1xf32>
    %33 = arith.mulf %29, %32 : vector<16x1xf32>
    %34 = vector.broadcast %33 : vector<16x1xf32> to vector<16x8xf32>
    %35 = arith.mulf %26, %34 : vector<16x8xf32>
    %c0_20 = arith.constant 0 : index
    %c0_21 = arith.constant 0 : index
    %36 = vector.load %arg8[%c0_20, %c0_21] : memref<16x8xf32, #tpu.memory_space<vmem>>, vector<16x8xf32>
    tpu.vector_store %arg8[%c0_20, %c0_21], %35 {strides = array<i32>} : memref<16x8xf32, #tpu.memory_space<vmem>>, vector<16x8xf32>,
    return
  }
  func.func @transform_0(%arg0: i32) -> (i32, i32) {
    %c0_i32 = arith.constant 0 : i32
    %c0_i32_0 = arith.constant 0 : i32
    return %arg0, %c0_i32 : i32, i32
  }
  func.func @transform_1(%arg0: i32) -> (i32, i32) {
    %c0_i32 = arith.constant 0 : i32
    %c0_i32_0 = arith.constant 0 : i32
    %c0_i32_1 = arith.constant 0 : i32
    return %c0_i32, %c0_i32_0 : i32, i32
  }
  func.func @transform_2(%arg0: i32) -> (i32, i32) {
    %c0_i32 = arith.constant 0 : i32
    %c0_i32_0 = arith.constant 0 : i32
    %c0_i32_1 = arith.constant 0 : i32
    return %c0_i32, %c0_i32_0 : i32, i32
  }
  func.func @transform_3(%arg0: i32) -> (i32, i32) {
    %c0_i32 = arith.constant 0 : i32
    %c0_i32_0 = arith.constant 0 : i32
    %c0_i32_1 = arith.constant 0 : i32
    return %c0_i32, %c0_i32_0 : i32, i32
  }
  func.func @transform_4(%arg0: i32) -> (i32, i32) {
    %c0_i32 = arith.constant 0 : i32
    %c0_i32_0 = arith.constant 0 : i32
    %c0_i32_1 = arith.constant 0 : i32
    return %c0_i32, %c0_i32_0 : i32, i32
  }
  func.func @transform_5(%arg0: i32) -> (i32, i32) {
    %c0_i32 = arith.constant 0 : i32
    %c0_i32_0 = arith.constant 0 : i32
    %c0_i32_1 = arith.constant 0 : i32
    return %c0_i32, %c0_i32_0 : i32, i32
  }
  func.func @transform_6(%arg0: i32) -> (i32, i32) {
    %c0_i32 = arith.constant 0 : i32
    %c0_i32_0 = arith.constant 0 : i32
    %c0_i32_1 = arith.constant 0 : i32
    return %c0_i32, %c0_i32_0 : i32, i32
  }
  func.func @transform_7(%arg0: i32) -> (i32, i32) {
    %c0_i32 = arith.constant 0 : i32
    %c0_i32_0 = arith.constant 0 : i32
    return %arg0, %c0_i32 : i32, i32
  }
}

</mosaic_0001>

<llo_original>
// kernel: actor_forward.1
$region0: #{actor_forward.1}
  #allocation0 [shape = 'u32[]', space=smem, size = 0x4, offset = 0x4, fixed_abs, tag = 'smem constant byte address 0x4 - core index']
  #allocation1 [shape = 'u32[144,128]{1,0:T(1,128)}', space=vmem, size = 0x12000, scoped, tag = 'internal scratch']
  %s0 = inlined_call_operand.vmem [shape: bf16[16,16], index: 0, kind: input, shape index: {}]
  %s1 = inlined_call_operand.vmem [shape: bf16[16,128], index: 1, kind: input, shape index: {}]
  %s2 = inlined_call_operand.vmem [shape: f32[1,128], index: 2, kind: input, shape index: {}]
  %s3 = inlined_call_operand.vmem [shape: bf16[128,128], index: 3, kind: input, shape index: {}]
  %s4 = inlined_call_operand.vmem [shape: f32[1,128], index: 4, kind: input, shape index: {}]
  %s5 = inlined_call_operand.vmem [shape: bf16[128,8], index: 5, kind: input, shape index: {}]
  %s6 = inlined_call_operand.vmem [shape: f32[1,8], index: 6, kind: input, shape index: {}]
  %s7 = inlined_call_operand.vmem [shape: f32[16,8], index: 7, kind: output, shape index: {}]
  %s8 = sld [smem:[#allocation0]]
  $region38: #{actor_forward.1} parent=0
    _
  %s10 = ssub.s32 1, %s8
  %s11 = scalar_select 0, %s10, %s8
  // Predicated region
  $region2: #{actor_forward.1} parent=0 // pred_check
    _
  $region3: #{actor_forward.1} parent=0 // pred_check_branch
    %13 = sbr.rel (0) target = $region5
  $region4: #{actor_forward.1} parent=0 // pred_region
    _
  $region5: #{actor_forward.1} parent=0 // pred_fallthru
    _
  // Predicated region
  $region6: #{actor_forward.1} parent=0 // pred_check
    _
  $region7: #{actor_forward.1} parent=0 // pred_check_branch
    %15 = sbr.rel (0) target = $region9
  $region8: #{actor_forward.1} parent=0 // pred_region
    _
  $region9: #{actor_forward.1} parent=0 // pred_fallthru
    _
  // Predicated region
  $region10: #{actor_forward.1} parent=0 // pred_check
    _
  $region11: #{actor_forward.1} parent=0 // pred_check_branch
    %17 = sbr.rel (0) target = $region13
  $region12: #{actor_forward.1} parent=0 // pred_region
    _
  $region13: #{actor_forward.1} parent=0 // pred_fallthru
    _
  // Predicated region
  $region14: #{actor_forward.1} parent=0 // pred_check
    _
  $region15: #{actor_forward.1} parent=0 // pred_check_branch
    %19 = sbr.rel (0) target = $region17
  $region16: #{actor_forward.1} parent=0 // pred_region
    _
  $region17: #{actor_forward.1} parent=0 // pred_fallthru
    _
  // Predicated region
  $region18: #{actor_forward.1} parent=0 // pred_check
    _
  $region19: #{actor_forward.1} parent=0 // pred_check_branch
    %21 = sbr.rel (0) target = $region21
  $region20: #{actor_forward.1} parent=0 // pred_region
    _
  $region21: #{actor_forward.1} parent=0 // pred_fallthru
    _
  // Predicated region
  $region22: #{actor_forward.1} parent=0 // pred_check
    _
  $region23: #{actor_forward.1} parent=0 // pred_check_branch
    %23 = sbr.rel (0) target = $region25
  $region24: #{actor_forward.1} parent=0 // pred_region
    _
  $region25: #{actor_forward.1} parent=0 // pred_fallthru
    _
  // Predicated region
  $region26: #{actor_forward.1} parent=0 // pred_check
    _
  $region27: #{actor_forward.1} parent=0 // pred_check_branch
    %25 = sbr.rel (0) target = $region29
  $region28: #{actor_forward.1} parent=0 // pred_region
    _
  $region29: #{actor_forward.1} parent=0 // pred_fallthru
    _
  %v27 = vld [vmem:[%s0] sm:$0xf]
  %v28 = vld [vmem:[%s0 + $0x4] sm:$0xf]
  %v29 = vld [vmem:[%s1] sm:$0xf]
  %v30 = vld [vmem:[%s1 + $0x4] sm:$0xf]
  %v31 = vld [vmem:[%s2] sm:$0x1]
  %v33 = vlaneseq
  %v34 = vshrl.u32 %v33, 7
  %v35 = vsub.s32 0, %v34
  %v36 = vrot.slane %v31, %v35
  %v40 = vunpack.c.l.b16 %v27
  %v41 = vunpack.c.l.b16 %v28
  %v42 = vpack.c.b16 %v41, %v40
  %v45 = vunpack.c.l.b16 %v29
  %v46 = vunpack.c.l.b16 %v30
  %v47 = vpack.c.b16 %v46, %v45
  %vm49 = vcmask 130048
  %v51 = vsel %vm49, %v42, 0
  %53 = vmatprep.subr.bf16.mxu0 0
  %54 = vmatpush1.bf16.msra.mxu0 %v47
  %55 = vmatprep.subr.bf16.mxu0 0
  %56 = vmatpush1.bf16.msra.mxu0 0
  %57 = vmatprep.subr.bf16.mxu0 0
  %58 = vmatpush1.bf16.msra.mxu0 0
  %59 = vmatprep.subr.bf16.mxu0 0
  %60 = vmatpush1.bf16.msra.mxu0 0
  %61 = vmatprep.subr.bf16.mxu0 0
  %62 = vmatpush1.bf16.msra.mxu0 0
  %63 = vmatprep.subr.bf16.mxu0 0
  %64 = vmatpush1.bf16.msra.mxu0 0
  %65 = vmatprep.subr.bf16.mxu0 0
  %66 = vmatpush1.bf16.msra.mxu0 0
  %67 = vmatprep.subr.bf16.mxu0 0
  %68 = vmatpush1.bf16.msra.mxu0 0
  %69 = vmatprep.subr.bf16.mxu0 0
  %70 = vmatpush1.bf16.msra.mxu0 0
  %71 = vmatprep.subr.bf16.mxu0 0
  %72 = vmatpush1.bf16.msra.mxu0 0
  %73 = vmatprep.subr.bf16.mxu0 0
  %74 = vmatpush1.bf16.msra.mxu0 0
  %75 = vmatprep.subr.bf16.mxu0 0
  %76 = vmatpush1.bf16.msra.mxu0 0
  %77 = vmatprep.subr.bf16.mxu0 0
  %78 = vmatpush1.bf16.msra.mxu0 0
  %79 = vmatprep.subr.bf16.mxu0 0
  %80 = vmatpush1.bf16.msra.mxu0 0
  %81 = vmatprep.subr.bf16.mxu0 0
  %82 = vmatpush1.bf16.msra.mxu0 0
  %83 = vmatprep.subr.bf16.mxu0 0
  %84 = vmatpush1.bf16.msra.mxu0 0
  %85 = vmatprep.mubr.bf16.mxu0 0
  %86 = vmatmul.mubr.bf16.gmra.mrb[0].mxu0 %v51
  %v87 = vpop.f32.mrb[0].mxu0
  %v88 = vadd.f32 %v36, %v87
  %v89 = vpop.f32.mrb[0].mxu0
  %v90 = vpop.f32.mrb[0].mxu0
  %v91 = vadd.f32 %v36, %v90
  %v92 = vpop.f32.mrb[0].mxu0
  %93 = vdwg.mxu0
  %v94 = vmax.f32 %v88, 0.0
  %v95 = vmax.f32 %v91, 0.0
  %v96 = vpack.c.bf16 %v95, %v94
  %v97 = vld [vmem:[%s3] sm:$0xf]
  %v98 = vld [vmem:[%s3 + $0x4] sm:$0xf]
  %v99 = vld [vmem:[%s3 + $0x8] sm:$0xf]
  %v100 = vld [vmem:[%s3 + $0xc] sm:$0xf]
  %v101 = vld [vmem:[%s3 + $0x10] sm:$0xf]
  %v102 = vld [vmem:[%s3 + $0x14] sm:$0xf]
  %v103 = vld [vmem:[%s3 + $0x18] sm:$0xf]
  %v104 = vld [vmem:[%s3 + $0x1c] sm:$0xf]
  %v105 = vld [vmem:[%s3 + $0x20] sm:$0xf]
  %v106 = vld [vmem:[%s3 + $0x24] sm:$0xf]
  %v107 = vld [vmem:[%s3 + $0x28] sm:$0xf]
  %v108 = vld [vmem:[%s3 + $0x2c] sm:$0xf]
  %v109 = vld [vmem:[%s3 + $0x30] sm:$0xf]
  %v110 = vld [vmem:[%s3 + $0x34] sm:$0xf]
  %v111 = vld [vmem:[%s3 + $0x38] sm:$0xf]
  %v112 = vld [vmem:[%s3 + $0x3c] sm:$0xf]
  %v113 = vld [vmem:[%s4] sm:$0x1]
  %v115 = vlaneseq
  %v116 = vshrl.u32 %v115, 7
  %v117 = vsub.s32 0, %v116
  %v118 = vrot.slane %v113, %v117
  %v136 = vunpack.c.l.b16 %v97
  %v137 = vunpack.c.l.b16 %v98
  %v138 = vunpack.c.l.b16 %v99
  %v139 = vunpack.c.l.b16 %v100
  %v140 = vunpack.c.l.b16 %v101
  %v141 = vunpack.c.l.b16 %v102
  %v142 = vunpack.c.l.b16 %v103
  %v143 = vunpack.c.l.b16 %v104
  %v144 = vunpack.c.l.b16 %v105
  %v145 = vunpack.c.l.b16 %v106
  %v146 = vunpack.c.l.b16 %v107
  %v147 = vunpack.c.l.b16 %v108
  %v148 = vunpack.c.l.b16 %v109
  %v149 = vunpack.c.l.b16 %v110
  %v150 = vunpack.c.l.b16 %v111
  %v151 = vunpack.c.l.b16 %v112
  %v152 = vpack.c.b16 %v137, %v136
  %v153 = vpack.c.b16 %v139, %v138
  %v154 = vpack.c.b16 %v141, %v140
  %v155 = vpack.c.b16 %v143, %v142
  %v156 = vpack.c.b16 %v145, %v144
  %v157 = vpack.c.b16 %v147, %v146
  %v158 = vpack.c.b16 %v149, %v148
  %v159 = vpack.c.b16 %v151, %v150
  %168 = vmatprep.subr.bf16.mxu0 0
  %169 = vmatpush1.bf16.msra.mxu0 %v152
  %170 = vmatprep.subr.bf16.mxu0 0
  %171 = vmatpush1.bf16.msra.mxu0 %v153
  %172 = vmatprep.subr.bf16.mxu0 0
  %173 = vmatpush1.bf16.msra.mxu0 %v154
  %174 = vmatprep.subr.bf16.mxu0 0
  %175 = vmatpush1.bf16.msra.mxu0 %v155
  %176 = vmatprep.subr.bf16.mxu0 0
  %177 = vmatpush1.bf16.msra.mxu0 %v156
  %178 = vmatprep.subr.bf16.mxu0 0
  %179 = vmatpush1.bf16.msra.mxu0 %v157
  %180 = vmatprep.subr.bf16.mxu0 0
  %181 = vmatpush1.bf16.msra.mxu0 %v158
  %182 = vmatprep.subr.bf16.mxu0 0
  %183 = vmatpush1.bf16.msra.mxu0 %v159
  %184 = vmatprep.subr.bf16.mxu0 0
  %185 = vmatpush1.bf16.msra.mxu0 0
  %186 = vmatprep.subr.bf16.mxu0 0
  %187 = vmatpush1.bf16.msra.mxu0 0
  %188 = vmatprep.subr.bf16.mxu0 0
  %189 = vmatpush1.bf16.msra.mxu0 0
  %190 = vmatprep.subr.bf16.mxu0 0
  %191 = vmatpush1.bf16.msra.mxu0 0
  %192 = vmatprep.subr.bf16.mxu0 0
  %193 = vmatpush1.bf16.msra.mxu0 0
  %194 = vmatprep.subr.bf16.mxu0 0
  %195 = vmatpush1.bf16.msra.mxu0 0
  %196 = vmatprep.subr.bf16.mxu0 0
  %197 = vmatpush1.bf16.msra.mxu0 0
  %198 = vmatprep.subr.bf16.mxu0 0
  %199 = vmatpush1.bf16.msra.mxu0 0
  %200 = vmatprep.mubr.bf16.mxu0 0
  %201 = vmatmul.mubr.bf16.gmra.mrb[0].mxu0 %v96
  %v202 = vpop.f32.mrb[0].mxu0
  %v203 = vadd.f32 %v118, %v202
  %v204 = vpop.f32.mrb[0].mxu0
  %v205 = vpop.f32.mrb[0].mxu0
  %v206 = vadd.f32 %v118, %v205
  %v207 = vpop.f32.mrb[0].mxu0
  %208 = vdwg.mxu0
  %v209 = vmax.f32 %v203, 0.0
  %v210 = vmax.f32 %v206, 0.0
  %v211 = vpack.c.bf16 %v210, %v209
  %v212 = vld [vmem:[%s5] sm:$0xf]
  %v213 = vld [vmem:[%s5 + $0x4] sm:$0xf]
  %v214 = vld [vmem:[%s5 + $0x8] sm:$0xf]
  %v215 = vld [vmem:[%s5 + $0xc] sm:$0xf]
  %v216 = vld [vmem:[%s5 + $0x10] sm:$0xf]
  %v217 = vld [vmem:[%s5 + $0x14] sm:$0xf]
  %v218 = vld [vmem:[%s5 + $0x18] sm:$0xf]
  %v219 = vld [vmem:[%s5 + $0x1c] sm:$0xf]
  %v220 = vld [vmem:[%s5 + $0x20] sm:$0xf]
  %v221 = vld [vmem:[%s5 + $0x24] sm:$0xf]
  %v222 = vld [vmem:[%s5 + $0x28] sm:$0xf]
  %v223 = vld [vmem:[%s5 + $0x2c] sm:$0xf]
  %v224 = vld [vmem:[%s5 + $0x30] sm:$0xf]
  %v225 = vld [vmem:[%s5 + $0x34] sm:$0xf]
  %v226 = vld [vmem:[%s5 + $0x38] sm:$0xf]
  %v227 = vld [vmem:[%s5 + $0x3c] sm:$0xf]
  %v228 = vld [vmem:[%s6] sm:$0x1]
  %v230 = vlaneseq
  %v231 = vshrl.u32 %v230, 7
  %v232 = vsub.s32 0, %v231
  %v233 = vrot.slane %v228, %v232
  %v251 = vunpack.c.l.b16 %v212
  %v252 = vunpack.c.l.b16 %v213
  %v253 = vunpack.c.l.b16 %v214
  %v254 = vunpack.c.l.b16 %v215
  %v255 = vunpack.c.l.b16 %v216
  %v256 = vunpack.c.l.b16 %v217
  %v257 = vunpack.c.l.b16 %v218
  %v258 = vunpack.c.l.b16 %v219
  %v259 = vunpack.c.l.b16 %v220
  %v260 = vunpack.c.l.b16 %v221
  %v261 = vunpack.c.l.b16 %v222
  %v262 = vunpack.c.l.b16 %v223
  %v263 = vunpack.c.l.b16 %v224
  %v264 = vunpack.c.l.b16 %v225
  %v265 = vunpack.c.l.b16 %v226
  %v266 = vunpack.c.l.b16 %v227
  %v267 = vpack.c.b16 %v252, %v251
  %v268 = vpack.c.b16 %v254, %v253
  %v269 = vpack.c.b16 %v256, %v255
  %v270 = vpack.c.b16 %v258, %v257
  %v271 = vpack.c.b16 %v260, %v259
  %v272 = vpack.c.b16 %v262, %v261
  %v273 = vpack.c.b16 %v264, %v263
  %v274 = vpack.c.b16 %v266, %v265
  %283 = vmatprep.subr.bf16.mxu0 0
  %284 = vmatpush1.bf16.msra.mxu0 %v267
  %285 = vmatprep.subr.bf16.mxu0 0
  %286 = vmatpush1.bf16.msra.mxu0 %v268
  %287 = vmatprep.subr.bf16.mxu0 0
  %288 = vmatpush1.bf16.msra.mxu0 %v269
  %289 = vmatprep.subr.bf16.mxu0 0
  %290 = vmatpush1.bf16.msra.mxu0 %v270
  %291 = vmatprep.subr.bf16.mxu0 0
  %292 = vmatpush1.bf16.msra.mxu0 %v271
  %293 = vmatprep.subr.bf16.mxu0 0
  %294 = vmatpush1.bf16.msra.mxu0 %v272
  %295 = vmatprep.subr.bf16.mxu0 0
  %296 = vmatpush1.bf16.msra.mxu0 %v273
  %297 = vmatprep.subr.bf16.mxu0 0
  %298 = vmatpush1.bf16.msra.mxu0 %v274
  %299 = vmatprep.subr.bf16.mxu0 0
  %300 = vmatpush1.bf16.msra.mxu0 0
  %301 = vmatprep.subr.bf16.mxu0 0
  %302 = vmatpush1.bf16.msra.mxu0 0
  %303 = vmatprep.subr.bf16.mxu0 0
  %304 = vmatpush1.bf16.msra.mxu0 0
  %305 = vmatprep.subr.bf16.mxu0 0
  %306 = vmatpush1.bf16.msra.mxu0 0
  %307 = vmatprep.subr.bf16.mxu0 0
  %308 = vmatpush1.bf16.msra.mxu0 0
  %309 = vmatprep.subr.bf16.mxu0 0
  %310 = vmatpush1.bf16.msra.mxu0 0
  %311 = vmatprep.subr.bf16.mxu0 0
  %312 = vmatpush1.bf16.msra.mxu0 0
  %313 = vmatprep.subr.bf16.mxu0 0
  %314 = vmatpush1.bf16.msra.mxu0 0
  %315 = vmatprep.mubr.bf16.mxu0 0
  %316 = vmatmul.mubr.bf16.gmra.mrb[0].mxu0 %v211
  %v317 = vpop.f32.mrb[0].mxu0
  %v318 = vadd.f32 %v233, %v317
  %v319 = vpop.f32.mrb[0].mxu0
  %v320 = vpop.f32.mrb[0].mxu0
  %v321 = vadd.f32 %v233, %v320
  %v322 = vpop.f32.mrb[0].mxu0
  %323 = vdwg.mxu0
  %vm324 = vcmask 64512
  %v325 = vsel %vm324, %v318, -inf
  %326 = vmax.xlane.f32.xlu0 %v325
  %v327 = vpop.xlane.xlu0 %326
  %v328 = vsel %vm324, %v321, -inf
  %329 = vmax.xlane.f32.xlu0 %v328
  %v330 = vpop.xlane.xlu0 %329
  %v331 = vsub.f32 %v318, %v327
  %v332 = vsub.f32 %v321, %v330
  %v333 = vmul.f32 %v331, 1.442695
  %v334 = vpow.pop %v333
  %v335 = vmul.f32 %v332, 1.442695
  %v336 = vpow.pop %v335
  %v337 = vsel %vm324, %v334, 0.0
  %338 = vadd.xlane.f32.xlu0 %v337
  %v339 = vpop.xlane.xlu0 %338
  %v340 = vsel %vm324, %v336, 0.0
  %341 = vadd.xlane.f32.xlu0 %v340
  %v342 = vpop.xlane.xlu0 %341
  %v343 = vrcp.pop %v339
  %v344 = vrcp.pop %v342
  %v345 = vmul.f32 %v339, %v343
  %v346 = vmul.f32 %v342, %v344
  %v347 = vsub.f32 2.0, %v345
  %v348 = vsub.f32 2.0, %v346
  %v349 = vmul.f32 %v343, %v347
  %v350 = vmul.f32 %v344, %v348
  %v351 = vmul.f32 %v334, %v349
  %v352 = vmul.f32 %v336, %v350
  %353 = vst.msk [vmem:[%s7] sm:$0xff] %vm324, %v351
  %354 = vst.msk [vmem:[%s7 + $0x8] sm:$0xff] %vm324, %v352
  // Predicated region
  $region30: #{actor_forward.1} parent=0 // pred_check
    _
  $region31: #{actor_forward.1} parent=0 // pred_check_branch
    %356 = sbr.rel (0) target = $region33
  $region32: #{actor_forward.1} parent=0 // pred_region
    _
  $region33: #{actor_forward.1} parent=0 // pred_fallthru
    _
  // Predicated region
  $region34: #{actor_forward.1} parent=0 // pred_check
    _
  $region35: #{actor_forward.1} parent=0 // pred_check_branch
    %358 = sbr.rel (0) target = $region37
  $region36: #{actor_forward.1} parent=0 // pred_region
    _
  $region37: #{actor_forward.1} parent=0 // pred_fallthru
    _

</llo_original>
